<compile_context>
chip_gen: v7x
topology: tpu7x:2x2x1
jax: 0.10.0
libtpu: 0.0.40
codegen_flags: <defaults>
</compile_context>

<pallas_src>
import functools

import jax
import jax.numpy as jnp
from jax.experimental import pallas as pl
from jax.experimental.pallas import tpu as pltpu


def _round_up(x: int, m: int) -> int:
    return ((x + m - 1) // m) * m


def _sublane_pack(itemsize: int) -> int:
    # Second-minor (row) padding granularity: 8 for f32, 16 for bf16, 32 for int8.
    return max(32 // max(itemsize, 1), 8)


def _vmem_capacity_bytes() -> int:
    try:
        return int(pltpu.get_tpu_info().vmem_capacity_bytes)
    except Exception:
        return 64 << 20          # conservative fallback (v7x per-core VMEM)


def _choose_tile_d(b: int, d: int, itemsize: int, vmem_cap: int) -> int:
    """Feature-tile width in lanes (multiple of 128).

    One pipeline buffer gets ~1/5 of per-core VMEM (the BlockSpec pipeline
    double-buffers the input, and the masked/nan-cleaned tile is materialized
    once more before the MXU consumes it), capped at 24 MiB/buffer where VMEM
    is plentiful (v5e/v6e).  This keeps per-step HBM bytes far above the
    ~0.35 us grid-step overhead on every generation.
    """
    per_buf = min(vmem_cap // 5, 24 << 20)
    rows_pad = _round_up(max(b, 1), _sublane_pack(itemsize))
    tile = per_buf // (rows_pad * itemsize)
    tile = max((tile // 128) * 128, 128)
    tile = min(tile, _round_up(d, 128))          # never wider than needed
    return tile


def _gram_kernel(x_ref, g_ref, *, d: int, tile_d: int, tiles_per_split: int):
    """Accumulate the raw (B, B) Gram of one (B, tile_d) feature slab.

    grid = (num_splits, tiles_per_split): axis 0 is "parallel" (one split per
    TensorCore on v7x), axis 1 is the feature reduction (last, as usual).
    g_ref is the per-split partial Gram and doubles as the accumulator: its
    block index is constant along the reduction axis, so it stays resident in
    VMEM and is written back to HBM once per split.
    """
    k = pl.program_id(1)

    @pl.when(k == 0)
    def _init():
        g_ref[...] = jnp.zeros_like(g_ref)

    t = pl.program_id(0) * tiles_per_split + k          # global feature-tile index
    x = x_ref[...]                                       # (B, tile_d), native dtype
    # Column-validity mask: zeros the padded tail of the last real tile and any
    # over-extended (clamped, re-read) tile of an uneven split; also guards
    # against garbage in Pallas' out-of-bounds edge padding.
    col = t * tile_d + jax.lax.broadcasted_iota(jnp.int32, x.shape, 1)
    x = jnp.where(col < d, x, jnp.zeros_like(x))
    x = jnp.nan_to_num(x)                                # column-local, exact per tile
    # X @ X^T contracted over the long feature axis (same contraction pattern
    # as the standard flash-attention q.k^T einsum, handled natively by the
    # MXU): native-dtype operands, f32 accumulation.
    g_ref[...] += jax.lax.dot_general(
        x, x,
        dimension_numbers=(((1,), (1,)), ((), ())),
        preferred_element_type=jnp.float32,
    )


def _feature_gram(x2d):
    """One streaming HBM pass: raw Gram G = clean(x) @ clean(x)^T in f32."""
    b, d = x2d.shape
    itemsize = jnp.dtype(x2d.dtype).itemsize
    vmem_cap = _vmem_capacity_bytes()

    tile_d = _choose_tile_d(b, d, itemsize, vmem_cap)
    total_tiles = -(-d // tile_d)
    # Split the feature reduction across (up to) two TensorCores (v7x).  Odd
    # tile counts only split when large enough that the single redundant
    # (fully masked) tile read is noise on single-core chips.
    if (total_tiles >= 2 and total_tiles % 2 == 0) or total_tiles >= 8:
        num_splits = 2
    else:
        num_splits = 1
    tiles_per_split = -(-total_tiles // num_splits)
    last_tile = total_tiles - 1

    if num_splits * tiles_per_split > total_tiles:
        # Clamp so an over-extended split never DMAs a fully out-of-bounds
        # block; its contribution is masked to zero in the kernel.
        in_index_map = lambda s, k: (0, jnp.minimum(s * tiles_per_split + k, last_tile))
    else:
        in_index_map = lambda s, k: (0, s * tiles_per_split + k)

    rows_pad = _round_up(max(b, 1), _sublane_pack(itemsize))
    in_buf = rows_pad * tile_d * itemsize
    # 2 pipeline buffers + materialized clean tile + Gram blocks + slack.
    vmem_limit = int(min(max(4 * in_buf + (8 << 20), 16 << 20),
                         int(vmem_cap * 0.9)))

    kernel = functools.partial(_gram_kernel, d=d, tile_d=tile_d,
                               tiles_per_split=tiles_per_split)

    partials = pl.pallas_call(
        kernel,
        out_shape=jax.ShapeDtypeStruct((num_splits, b, b), jnp.float32),
        grid_spec=pltpu.PrefetchScalarGridSpec(
            num_scalar_prefetch=0,
            grid=(num_splits, tiles_per_split),
            in_specs=[pl.BlockSpec((b, tile_d), in_index_map)],
            out_specs=pl.BlockSpec((None, b, b), lambda s, k: (s, 0, 0)),
        ),
        compiler_params=pltpu.CompilerParams(
            dimension_semantics=("parallel", "arbitrary"),
            vmem_limit_bytes=vmem_limit,
        ),
    )(x2d)
    return jnp.sum(partials, axis=0)


def diff_loss(input1, input2):
    """Pallas implementation of DiffLoss.forward (returns a scalar f32)."""
    b = input1.shape[0]
    x1 = jnp.reshape(input1, (b, -1))
    x2 = jnp.reshape(input2, (b, -1))
    d1, d2 = x1.shape[1], x2.shape[1]

    g1 = _feature_gram(x1)
    g2 = _feature_gram(x2)

    # TODO(synk): for very large batch (B >= ~2048) tile the Gram itself over a
    # 2-D (row-block, col-block) grid instead of one resident (B, B) block.

    def _normalized_gram(g):
        # Centering folded into Gram space: Gc = C G C with C = I - 1/B, i.e.
        # rank-1 row/col mean subtraction (exact algebra; note accumulation of
        # uncentered x.x^T carries mean^2*D before cancellation, acceptable at
        # f32 for zero-ish-mean features).
        gc = (g - jnp.mean(g, axis=0, keepdims=True)
                - jnp.mean(g, axis=1, keepdims=True) + jnp.mean(g))
        # Row L2 norms from the centered diagonal; exact sqrt/divide (O(B^2)).
        n = jnp.sqrt(jnp.maximum(jnp.diagonal(gc), 0.0)) + 1e-6
        inv = 1.0 / n
        return gc * inv[:, None] * inv[None, :]

    a1 = _normalized_gram(g1)
    a2 = _normalized_gram(g2)
    # loss = tr(A1 @ A2) / (D1 * D2); both A are symmetric.
    return jnp.sum(a1 * a2) / (d1 * d2)


def _diff_loss_ref(input1, input2):
    """Pure-JAX reference mirroring the PyTorch forward."""
    b = input1.shape[0]
    x1 = jnp.nan_to_num(jnp.reshape(input1, (b, -1)).astype(jnp.float32))
    x2 = jnp.nan_to_num(jnp.reshape(input2, (b, -1)).astype(jnp.float32))
    x1 = x1 - jnp.mean(x1, axis=0, keepdims=True)
    x2 = x2 - jnp.mean(x2, axis=0, keepdims=True)
    x1 = x1 / (jnp.linalg.norm(x1, axis=1, keepdims=True) + 1e-6)
    x2 = x2 / (jnp.linalg.norm(x2, axis=1, keepdims=True) + 1e-6)
    m = x1.T @ x2
    return jnp.mean(m ** 2)


if __name__ == "__main__":
    import numpy as np

    key = jax.random.PRNGKey(0)
    k1, k2 = jax.random.split(key)

    # DiffLoss has no parameters; inputs are two NCHW feature tensors that get
    # flattened per-sample inside the forward pass.
    input1 = jax.random.normal(k1, (2, 4, 16, 16), dtype=jnp.float32)
    input2 = jax.random.normal(k2, (2, 4, 16, 16), dtype=jnp.float32)
    # exercise the nan_to_num path
    input1 = input1.at[0, 0, 0, 0].set(jnp.nan)

    loss = jax.block_until_ready(jax.jit(diff_loss)(input1, input2))
    ref = jax.block_until_ready(_diff_loss_ref(input1, input2))

    # The loss itself is O(1e-6), so only a relative comparison is meaningful.
    np.testing.assert_allclose(np.asarray(loss), np.asarray(ref),
                               rtol=2e-2, atol=1e-10)
    print("KERNEL_OK")
</pallas_src>

<mosaic_0001>
module attributes {stable_mosaic.version = 11 : i64} {
  func.func @_gram_kernel(%arg0: i32, %arg1: i32, %arg2: memref<2x1024xf32, #tpu.memory_space<vmem>>, %arg3: memref<1x2x2xf32, #tpu.memory_space<vmem>>) attributes {dimension_semantics = [#tpu.dimension_semantics<parallel>, #tpu.dimension_semantics<arbitrary>], iteration_bounds = array<i64: 1, 1>, scalar_prefetch = 0 : i64, scratch_operands = 0 : i64, tpu.core_type = #tpu.core_type<tc>, window_params = [{transform_indices = @transform_0, window_bounds = array<i64: 2, 1024>}, {transform_indices = @transform_1, window_bounds = array<i64: 1, 2, 2>}]} {
    %c0_i32 = arith.constant 0 : i32
    %0 = arith.cmpi eq, %arg1, %c0_i32 : i32
    %1 = arith.extui %0 : i1 to i32
    %c0_i32_0 = arith.constant 0 : i32
    %2 = arith.cmpi ne, %1, %c0_i32_0 : i32
    scf.if %2 {
      %cst_15 = arith.constant 0.000000e+00 : f32
      %32 = vector.broadcast %cst_15 : f32 to vector<2x2xf32>
      %c0_16 = arith.constant 0 : index
      %c0_17 = arith.constant 0 : index
      %c0_18 = arith.constant 0 : index
      %33 = vector.load %arg3[%c0_16, %c0_17, %c0_18] : memref<1x2x2xf32, #tpu.memory_space<vmem>>, vector<1x2x2xf32>
      %34 = vector.shape_cast %33 : vector<1x2x2xf32> to vector<2x2xf32>
      %35 = vector.shape_cast %32 : vector<2x2xf32> to vector<1x2x2xf32>
      tpu.vector_store %arg3[%c0_16, %c0_17, %c0_18], %35 {strides = array<i32>} : memref<1x2x2xf32, #tpu.memory_space<vmem>>, vector<1x2x2xf32>,
    } else {
    }
    %c1_i32 = arith.constant 1 : i32
    %3 = arith.muli %arg0, %c1_i32 : i32
    %4 = arith.addi %3, %arg1 : i32
    %c0 = arith.constant 0 : index
    %c0_1 = arith.constant 0 : index
    %5 = vector.load %arg2[%c0, %c0_1] : memref<2x1024xf32, #tpu.memory_space<vmem>>, vector<2x1024xf32>
    %c1024_i32 = arith.constant 1024 : i32
    %6 = arith.muli %4, %c1024_i32 : i32
    %7 = tpu.iota {dimensions = array<i32: 1>} : vector<2x1024xi32>
    %8 = vector.broadcast %6 : i32 to vector<2x1024xi32>
    %9 = arith.addi %8, %7 : vector<2x1024xi32>
    %c1024_i32_2 = arith.constant 1024 : i32
    %10 = vector.broadcast %c1024_i32_2 : i32 to vector<2x1024xi32>
    %11 = arith.cmpi slt, %9, %10 : vector<2x1024xi32>
    %cst = arith.constant 0.000000e+00 : f32
    %12 = vector.broadcast %cst : f32 to vector<2x1024xf32>
    %13 = arith.select %11, %5, %12 : vector<2x1024xi1>, vector<2x1024xf32>
    %14 = arith.cmpf one, %13, %13 : vector<2x1024xf32>
    %cst_3 = arith.constant 0.000000e+00 : f32
    %15 = vector.broadcast %cst_3 : f32 to vector<2x1024xf32>
    %16 = arith.select %14, %15, %13 : vector<2x1024xi1>, vector<2x1024xf32>
    %cst_4 = arith.constant 0x7F800000 : f32
    %17 = vector.broadcast %cst_4 : f32 to vector<2x1024xf32>
    %18 = arith.cmpf oeq, %16, %17 : vector<2x1024xf32>
    %cst_5 = arith.constant 3.40282347E+38 : f32
    %19 = vector.broadcast %cst_5 : f32 to vector<2x1024xf32>
    %20 = arith.select %18, %19, %16 : vector<2x1024xi1>, vector<2x1024xf32>
    %cst_6 = arith.constant 0xFF800000 : f32
    %21 = vector.broadcast %cst_6 : f32 to vector<2x1024xf32>
    %22 = arith.cmpf oeq, %20, %21 : vector<2x1024xf32>
    %cst_7 = arith.constant -3.40282347E+38 : f32
    %23 = vector.broadcast %cst_7 : f32 to vector<2x1024xf32>
    %24 = arith.select %22, %23, %20 : vector<2x1024xi1>, vector<2x1024xf32>
    %c0_8 = arith.constant 0 : index
    %c0_9 = arith.constant 0 : index
    %c0_10 = arith.constant 0 : index
    %25 = vector.load %arg3[%c0_8, %c0_9, %c0_10] : memref<1x2x2xf32, #tpu.memory_space<vmem>>, vector<1x2x2xf32>
    %26 = vector.shape_cast %25 : vector<1x2x2xf32> to vector<2x2xf32>
    %cst_11 = arith.constant dense<0.000000e+00> : vector<2x2xf32>
    %27 = tpu.matmul %24, %24, %cst_11 {dimension_numbers = #tpu.dot_dimension_numbers<[1], [1], [0], [0], [0, 0, 1, 0], [], []>} : vector<2x1024xf32>, vector<2x1024xf32>, vector<2x2xf32> -> vector<2x2xf32>
    %28 = arith.addf %26, %27 : vector<2x2xf32>
    %c0_12 = arith.constant 0 : index
    %c0_13 = arith.constant 0 : index
    %c0_14 = arith.constant 0 : index
    %29 = vector.load %arg3[%c0_12, %c0_13, %c0_14] : memref<1x2x2xf32, #tpu.memory_space<vmem>>, vector<1x2x2xf32>
    %30 = vector.shape_cast %29 : vector<1x2x2xf32> to vector<2x2xf32>
    %31 = vector.shape_cast %28 : vector<2x2xf32> to vector<1x2x2xf32>
    tpu.vector_store %arg3[%c0_12, %c0_13, %c0_14], %31 {strides = array<i32>} : memref<1x2x2xf32, #tpu.memory_space<vmem>>, vector<1x2x2xf32>,
    return
  }
  func.func @transform_0(%arg0: i32, %arg1: i32) -> (i32, i32) {
    %c1_i32 = arith.constant 1 : i32
    %0 = arith.muli %arg0, %c1_i32 : i32
    %1 = arith.addi %0, %arg1 : i32
    %c0_i32 = arith.constant 0 : i32
    %c0_i32_0 = arith.constant 0 : i32
    return %c0_i32, %1 : i32, i32
  }
  func.func @transform_1(%arg0: i32, %arg1: i32) -> (i32, i32, i32) {
    %c0_i32 = arith.constant 0 : i32
    %c0_i32_0 = arith.constant 0 : i32
    %c0_i32_1 = arith.constant 0 : i32
    return %arg0, %c0_i32, %c0_i32_0 : i32, i32, i32
  }
}

</mosaic_0001>

<llo_original>
// kernel: diff_loss.2
$region0: #{diff_loss.2}
  #allocation0 [shape = 'u32[]', space=smem, size = 0x4, offset = 0x4, fixed_abs, tag = 'smem constant byte address 0x4 - core index']
  #allocation1 [shape = 'u32[144,128]{1,0:T(1,128)}', space=vmem, size = 0x12000, scoped, tag = 'internal scratch']
  %s0 = inlined_call_operand.vmem [shape: f32[2,1024], index: 0, kind: input, shape index: {}]
  %s1 = inlined_call_operand.vmem [shape: f32[1,2,2], index: 1, kind: output, shape index: {}]
  %s2 = sld [smem:[#allocation0]]
  $region18: #{diff_loss.2} parent=0
    _
  %s4 = ssub.s32 1, %s2
  %s5 = scalar_select 0, %s4, %s2
  // Predicated region
  $region2: #{diff_loss.2} parent=0 // pred_check
    _
  $region3: #{diff_loss.2} parent=0 // pred_check_branch
    %7 = sbr.rel (0) target = $region5
  $region4: #{diff_loss.2} parent=0 // pred_region
    %s8 = sadd.s32 0, 0
    %s9 = smul.u32 8, %s8
    %p10 = scmp.lt.s32.totalorder %s9, 7
    %s11 = scalar_select %p10, %s9, 7
    %s12 = smul.addr %s11, 2
    %s13 = scalar_lea.vmem %s0, %s12
    %s14 = sadd.s32 0, 0
    %s15 = smul.u32 8, %s14
  $region5: #{diff_loss.2} parent=0 // pred_fallthru
    _
  %s16 = sadd.s32 0, 0
  %s17 = smul.u32 8, %s16
  %p18 = scmp.lt.s32.totalorder %s17, 7
  %s19 = scalar_select %p18, %s17, 7
  %s20 = smul.addr %s19, 2
  %s21 = scalar_lea.vmem %s0, %s20
  %s22 = sadd.s32 0, 0
  %s23 = smul.u32 8, %s22
  %p24 = scmp.lt.s32.totalorder %s23, 7
  %s25 = scalar_select %p24, %s23, 7
  %s26 = smul.addr %s25, 2
  %s27 = scalar_lea.vmem %s0, %s26
  %s28 = sadd.s32 0, 0
  %s29 = smul.u32 8, %s28
  %p30 = scmp.eq.s32.totalorder 0, 0
  // Predicated region
  $region6: #{diff_loss.2} parent=0 // pred_check
    %p31 = pneg %p30
  $region7: #{diff_loss.2} parent=0 // pred_check_branch
    %33 = sbr.rel (%p31) target = $region9
  $region8: #{diff_loss.2} parent=0 // pred_region
    %vm34 = vcmask 9216
    %35 = vst.msk [vmem:[%s1] sm:$0x3] %vm34, 0.0
  $region9: #{diff_loss.2} parent=0 // pred_fallthru
    _
  %s36 = sadd.s32 0, 0
  %v37 = vld [vmem:[%s27] sm:$0xff]
  %v38 = vld [vmem:[%s27 + $0x8] sm:$0xff]
  %s39 = smul.u32 %s36, 1024
  %v40 = vlaneseq
  %v41 = vand.u32 %v40, 127
  %v42 = vadd.s32 %v41, 128
  %v43 = vadd.s32 %v41, 256
  %v44 = vadd.s32 %v41, 384
  %v45 = vadd.s32 %v41, 512
  %v46 = vadd.s32 %v41, 640
  %v47 = vadd.s32 %v41, 768
  %v48 = vadd.s32 %v41, 896
  %v49 = vstv %s39
  %v50 = vadd.s32 %v49, %v41
  %v51 = vadd.s32 %v49, %v42
  %v52 = vadd.s32 %v49, %v43
  %v53 = vadd.s32 %v49, %v44
  %v54 = vadd.s32 %v49, %v45
  %v55 = vadd.s32 %v49, %v46
  %v56 = vadd.s32 %v49, %v47
  %v57 = vadd.s32 %v49, %v48
  %vm58 = vcmp.lt.s32.totalorder %v50, 1024
  %vm59 = vcmp.lt.s32.totalorder %v51, 1024
  %vm60 = vcmp.lt.s32.totalorder %v52, 1024
  %vm61 = vcmp.lt.s32.totalorder %v53, 1024
  %vm62 = vcmp.lt.s32.totalorder %v54, 1024
  %vm63 = vcmp.lt.s32.totalorder %v55, 1024
  %vm64 = vcmp.lt.s32.totalorder %v56, 1024
  %vm65 = vcmp.lt.s32.totalorder %v57, 1024
  %v68 = vcombine.high %v37, %v37
  %v70 = vunpack.c.l.s4 1983009808
  %v71 = vunpack.c.0.s8 %v70
  %v72 = vlaneseq
  %v73 = vshrl.u32 %v72, 7
  %v74 = vsub.s32 %v71, %v73
  %v75 = vrot.slane %v37, %v74
  %v77 = vunpack.c.l.s4 1983009808
  %v78 = vunpack.c.0.s8 %v77
  %v79 = vlaneseq
  %v80 = vshrl.u32 %v79, 7
  %v81 = vsub.s32 %v78, %v80
  %v82 = vrot.slane %v68, %v81
  %v83 = vcombine.high %v75, %v75
  %v84 = vcombine.high %v82, %v82
  %v85 = vcombine.high %v38, %v38
  %v87 = vunpack.c.l.s4 1983009808
  %v88 = vunpack.c.0.s8 %v87
  %v89 = vlaneseq
  %v90 = vshrl.u32 %v89, 7
  %v91 = vsub.s32 %v88, %v90
  %v92 = vrot.slane %v38, %v91
  %v94 = vunpack.c.l.s4 1983009808
  %v95 = vunpack.c.0.s8 %v94
  %v96 = vlaneseq
  %v97 = vshrl.u32 %v96, 7
  %v98 = vsub.s32 %v95, %v97
  %v99 = vrot.slane %v85, %v98
  %v100 = vcombine.high %v92, %v92
  %v101 = vcombine.high %v99, %v99
  %v110 = vsel %vm58, %v75, 0.0
  %v111 = vsel %vm59, %v83, 0.0
  %v112 = vsel %vm60, %v82, 0.0
  %v113 = vsel %vm61, %v84, 0.0
  %v114 = vsel %vm62, %v92, 0.0
  %v115 = vsel %vm63, %v100, 0.0
  %v116 = vsel %vm64, %v99, 0.0
  %v117 = vsel %vm65, %v101, 0.0
  %vm118 = vcmp.ne.f32.partialorder %v110, %v110
  %vm119 = vcmp.ne.f32.partialorder %v111, %v111
  %vm120 = vcmp.ne.f32.partialorder %v112, %v112
  %vm121 = vcmp.ne.f32.partialorder %v113, %v113
  %vm122 = vcmp.ne.f32.partialorder %v114, %v114
  %vm123 = vcmp.ne.f32.partialorder %v115, %v115
  %vm124 = vcmp.ne.f32.partialorder %v116, %v116
  %vm125 = vcmp.ne.f32.partialorder %v117, %v117
  %v126 = vsel %vm118, 0.0, %v110
  %v127 = vsel %vm119, 0.0, %v111
  %v128 = vsel %vm120, 0.0, %v112
  %v129 = vsel %vm121, 0.0, %v113
  %v130 = vsel %vm122, 0.0, %v114
  %v131 = vsel %vm123, 0.0, %v115
  %v132 = vsel %vm124, 0.0, %v116
  %v133 = vsel %vm125, 0.0, %v117
  %vm134 = vcmp.eq.f32.partialorder %v126, inf
  %vm135 = vcmp.eq.f32.partialorder %v127, inf
  %vm136 = vcmp.eq.f32.partialorder %v128, inf
  %vm137 = vcmp.eq.f32.partialorder %v129, inf
  %vm138 = vcmp.eq.f32.partialorder %v130, inf
  %vm139 = vcmp.eq.f32.partialorder %v131, inf
  %vm140 = vcmp.eq.f32.partialorder %v132, inf
  %vm141 = vcmp.eq.f32.partialorder %v133, inf
  %v142 = vsel %vm134, 3.4028235e+38, %v126
  %v143 = vsel %vm135, 3.4028235e+38, %v127
  %v144 = vsel %vm136, 3.4028235e+38, %v128
  %v145 = vsel %vm137, 3.4028235e+38, %v129
  %v146 = vsel %vm138, 3.4028235e+38, %v130
  %v147 = vsel %vm139, 3.4028235e+38, %v131
  %v148 = vsel %vm140, 3.4028235e+38, %v132
  %v149 = vsel %vm141, 3.4028235e+38, %v133
  %vm150 = vcmp.eq.f32.partialorder %v142, -inf
  %vm151 = vcmp.eq.f32.partialorder %v143, -inf
  %vm152 = vcmp.eq.f32.partialorder %v144, -inf
  %vm153 = vcmp.eq.f32.partialorder %v145, -inf
  %vm154 = vcmp.eq.f32.partialorder %v146, -inf
  %vm155 = vcmp.eq.f32.partialorder %v147, -inf
  %vm156 = vcmp.eq.f32.partialorder %v148, -inf
  %vm157 = vcmp.eq.f32.partialorder %v149, -inf
  %v158 = vsel %vm150, -3.4028235e+38, %v142
  %v159 = vsel %vm151, -3.4028235e+38, %v143
  %v160 = vsel %vm152, -3.4028235e+38, %v144
  %v161 = vsel %vm153, -3.4028235e+38, %v145
  %v162 = vsel %vm154, -3.4028235e+38, %v146
  %v163 = vsel %vm155, -3.4028235e+38, %v147
  %v164 = vsel %vm156, -3.4028235e+38, %v148
  %v165 = vsel %vm157, -3.4028235e+38, %v149
  %v166 = vld [vmem:[%s1] sm:$0x3]
  %167 = vmatprep.subr.mxu0 %v159
  %168 = vmatpush1.xpose.msra.mxu0 %v158
  %169 = vmatprep.subr.mxu0 0.0
  %170 = vmatpush1.xpose.msra.mxu0 0.0
  %171 = vmatprep.subr.mxu0 0.0
  %172 = vmatpush1.xpose.msra.mxu0 0.0
  %173 = vmatprep.subr.mxu0 0.0
  %174 = vmatpush1.xpose.msra.mxu0 0.0
  %175 = vmatprep.subr.mxu0 0.0
  %176 = vmatpush1.xpose.msra.mxu0 0.0
  %177 = vmatprep.subr.mxu0 0.0
  %178 = vmatpush1.xpose.msra.mxu0 0.0
  %179 = vmatprep.subr.mxu0 0.0
  %180 = vmatpush1.xpose.msra.mxu0 0.0
  %181 = vmatprep.subr.mxu0 0.0
  %182 = vmatpush1.xpose.msra.mxu0 0.0
  %183 = vmatprep.subr.mxu0 0.0
  %184 = vmatpush1.xpose.msra.mxu0 0.0
  %185 = vmatprep.subr.mxu0 0.0
  %186 = vmatpush1.xpose.msra.mxu0 0.0
  %187 = vmatprep.subr.mxu0 0.0
  %188 = vmatpush1.xpose.msra.mxu0 0.0
  %189 = vmatprep.subr.mxu0 0.0
  %190 = vmatpush1.xpose.msra.mxu0 0.0
  %191 = vmatprep.subr.mxu0 0.0
  %192 = vmatpush1.xpose.msra.mxu0 0.0
  %193 = vmatprep.subr.mxu0 0.0
  %194 = vmatpush1.xpose.msra.mxu0 0.0
  %195 = vmatprep.subr.mxu0 0.0
  %196 = vmatpush1.xpose.msra.mxu0 0.0
  %197 = vmatprep.subr.mxu0 0.0
  %198 = vmatpush1.xpose.msra.mxu0 0.0
  %199 = vmatprep.subr.mxu0 0.0
  %200 = vmatpush1.xpose.msra.mxu0 0.0
  %201 = vmatprep.subr.mxu0 0.0
  %202 = vmatpush1.xpose.msra.mxu0 0.0
  %203 = vmatprep.subr.mxu0 0.0
  %204 = vmatpush1.xpose.msra.mxu0 0.0
  %205 = vmatprep.subr.mxu0 0.0
  %206 = vmatpush1.xpose.msra.mxu0 0.0
  %207 = vmatprep.subr.mxu0 0.0
  %208 = vmatpush1.xpose.msra.mxu0 0.0
  %209 = vmatprep.subr.mxu0 0.0
  %210 = vmatpush1.xpose.msra.mxu0 0.0
  %211 = vmatprep.subr.mxu0 0.0
  %212 = vmatpush1.xpose.msra.mxu0 0.0
  %213 = vmatprep.subr.mxu0 0.0
  %214 = vmatpush1.xpose.msra.mxu0 0.0
  %215 = vmatprep.subr.mxu0 0.0
  %216 = vmatpush1.xpose.msra.mxu0 0.0
  %217 = vmatprep.subr.mxu0 0.0
  %218 = vmatpush1.xpose.msra.mxu0 0.0
  %219 = vmatprep.subr.mxu0 0.0
  %220 = vmatpush1.xpose.msra.mxu0 0.0
  %221 = vmatprep.subr.mxu0 0.0
  %222 = vmatpush1.xpose.msra.mxu0 0.0
  %223 = vmatprep.subr.mxu0 0.0
  %224 = vmatpush1.xpose.msra.mxu0 0.0
  %225 = vmatprep.subr.mxu0 0.0
  %226 = vmatpush1.xpose.msra.mxu0 0.0
  %227 = vmatprep.subr.mxu0 0.0
  %228 = vmatpush1.xpose.msra.mxu0 0.0
  %229 = vmatprep.subr.mxu0 0.0
  %230 = vmatpush1.xpose.msra.mxu0 0.0
  %231 = vmatprep.mubr.f32.mxu0 %v159
  %232 = vmatmul.mubr.f32.gmra.mrb[0].mxu0 %v158
  %v233 = vpop.f32.mrb[0].mxu0
  %v234 = vadd.f32 0.0, %v233
  %v235 = vpop.f32.mrb[0].mxu0
  %236 = vdwg.mxu0
  %237 = vmatprep.subr.mxu0 %v161
  %238 = vmatpush1.xpose.msra.mxu0 %v160
  %239 = vmatprep.subr.mxu0 0.0
  %240 = vmatpush1.xpose.msra.mxu0 0.0
  %241 = vmatprep.subr.mxu0 0.0
  %242 = vmatpush1.xpose.msra.mxu0 0.0
  %243 = vmatprep.subr.mxu0 0.0
  %244 = vmatpush1.xpose.msra.mxu0 0.0
  %245 = vmatprep.subr.mxu0 0.0
  %246 = vmatpush1.xpose.msra.mxu0 0.0
  %247 = vmatprep.subr.mxu0 0.0
  %248 = vmatpush1.xpose.msra.mxu0 0.0
  %249 = vmatprep.subr.mxu0 0.0
  %250 = vmatpush1.xpose.msra.mxu0 0.0
  %251 = vmatprep.subr.mxu0 0.0
  %252 = vmatpush1.xpose.msra.mxu0 0.0
  %253 = vmatprep.subr.mxu0 0.0
  %254 = vmatpush1.xpose.msra.mxu0 0.0
  %255 = vmatprep.subr.mxu0 0.0
  %256 = vmatpush1.xpose.msra.mxu0 0.0
  %257 = vmatprep.subr.mxu0 0.0
  %258 = vmatpush1.xpose.msra.mxu0 0.0
  %259 = vmatprep.subr.mxu0 0.0
  %260 = vmatpush1.xpose.msra.mxu0 0.0
  %261 = vmatprep.subr.mxu0 0.0
  %262 = vmatpush1.xpose.msra.mxu0 0.0
  %263 = vmatprep.subr.mxu0 0.0
  %264 = vmatpush1.xpose.msra.mxu0 0.0
  %265 = vmatprep.subr.mxu0 0.0
  %266 = vmatpush1.xpose.msra.mxu0 0.0
  %267 = vmatprep.subr.mxu0 0.0
  %268 = vmatpush1.xpose.msra.mxu0 0.0
  %269 = vmatprep.subr.mxu0 0.0
  %270 = vmatpush1.xpose.msra.mxu0 0.0
  %271 = vmatprep.subr.mxu0 0.0
  %272 = vmatpush1.xpose.msra.mxu0 0.0
  %273 = vmatprep.subr.mxu0 0.0
  %274 = vmatpush1.xpose.msra.mxu0 0.0
  %275 = vmatprep.subr.mxu0 0.0
  %276 = vmatpush1.xpose.msra.mxu0 0.0
  %277 = vmatprep.subr.mxu0 0.0
  %278 = vmatpush1.xpose.msra.mxu0 0.0
  %279 = vmatprep.subr.mxu0 0.0
  %280 = vmatpush1.xpose.msra.mxu0 0.0
  %281 = vmatprep.subr.mxu0 0.0
  %282 = vmatpush1.xpose.msra.mxu0 0.0
  %283 = vmatprep.subr.mxu0 0.0
  %284 = vmatpush1.xpose.msra.mxu0 0.0
  %285 = vmatprep.subr.mxu0 0.0
  %286 = vmatpush1.xpose.msra.mxu0 0.0
  %287 = vmatprep.subr.mxu0 0.0
  %288 = vmatpush1.xpose.msra.mxu0 0.0
  %289 = vmatprep.subr.mxu0 0.0
  %290 = vmatpush1.xpose.msra.mxu0 0.0
  %291 = vmatprep.subr.mxu0 0.0
  %292 = vmatpush1.xpose.msra.mxu0 0.0
  %293 = vmatprep.subr.mxu0 0.0
  %294 = vmatpush1.xpose.msra.mxu0 0.0
  %295 = vmatprep.subr.mxu0 0.0
  %296 = vmatpush1.xpose.msra.mxu0 0.0
  %297 = vmatprep.subr.mxu0 0.0
  %298 = vmatpush1.xpose.msra.mxu0 0.0
  %299 = vmatprep.subr.mxu0 0.0
  %300 = vmatpush1.xpose.msra.mxu0 0.0
  %301 = vmatprep.mubr.f32.mxu0 %v161
  %302 = vmatmul.mubr.f32.gmra.mrb[0].mxu0 %v160
  %v303 = vpop.f32.mrb[0].mxu0
  %v304 = vadd.f32 %v234, %v303
  %v305 = vpop.f32.mrb[0].mxu0
  %306 = vdwg.mxu0
  %307 = vmatprep.subr.mxu0 %v163
  %308 = vmatpush1.xpose.msra.mxu0 %v162
  %309 = vmatprep.subr.mxu0 0.0
  %310 = vmatpush1.xpose.msra.mxu0 0.0
  %311 = vmatprep.subr.mxu0 0.0
  %312 = vmatpush1.xpose.msra.mxu0 0.0
  %313 = vmatprep.subr.mxu0 0.0
  %314 = vmatpush1.xpose.msra.mxu0 0.0
  %315 = vmatprep.subr.mxu0 0.0
  %316 = vmatpush1.xpose.msra.mxu0 0.0
  %317 = vmatprep.subr.mxu0 0.0
  %318 = vmatpush1.xpose.msra.mxu0 0.0
  %319 = vmatprep.subr.mxu0 0.0
  %320 = vmatpush1.xpose.msra.mxu0 0.0
  %321 = vmatprep.subr.mxu0 0.0
  %322 = vmatpush1.xpose.msra.mxu0 0.0
  %323 = vmatprep.subr.mxu0 0.0
  %324 = vmatpush1.xpose.msra.mxu0 0.0
  %325 = vmatprep.subr.mxu0 0.0
  %326 = vmatpush1.xpose.msra.mxu0 0.0
  %327 = vmatprep.subr.mxu0 0.0
  %328 = vmatpush1.xpose.msra.mxu0 0.0
  %329 = vmatprep.subr.mxu0 0.0
  %330 = vmatpush1.xpose.msra.mxu0 0.0
  %331 = vmatprep.subr.mxu0 0.0
  %332 = vmatpush1.xpose.msra.mxu0 0.0
  %333 = vmatprep.subr.mxu0 0.0
  %334 = vmatpush1.xpose.msra.mxu0 0.0
  %335 = vmatprep.subr.mxu0 0.0
  %336 = vmatpush1.xpose.msra.mxu0 0.0
  %337 = vmatprep.subr.mxu0 0.0
  %338 = vmatpush1.xpose.msra.mxu0 0.0
  %339 = vmatprep.subr.mxu0 0.0
  %340 = vmatpush1.xpose.msra.mxu0 0.0
  %341 = vmatprep.subr.mxu0 0.0
  %342 = vmatpush1.xpose.msra.mxu0 0.0
  %343 = vmatprep.subr.mxu0 0.0
  %344 = vmatpush1.xpose.msra.mxu0 0.0
  %345 = vmatprep.subr.mxu0 0.0
  %346 = vmatpush1.xpose.msra.mxu0 0.0
  %347 = vmatprep.subr.mxu0 0.0
  %348 = vmatpush1.xpose.msra.mxu0 0.0
  %349 = vmatprep.subr.mxu0 0.0
  %350 = vmatpush1.xpose.msra.mxu0 0.0
  %351 = vmatprep.subr.mxu0 0.0
  %352 = vmatpush1.xpose.msra.mxu0 0.0
  %353 = vmatprep.subr.mxu0 0.0
  %354 = vmatpush1.xpose.msra.mxu0 0.0
  %355 = vmatprep.subr.mxu0 0.0
  %356 = vmatpush1.xpose.msra.mxu0 0.0
  %357 = vmatprep.subr.mxu0 0.0
  %358 = vmatpush1.xpose.msra.mxu0 0.0
  %359 = vmatprep.subr.mxu0 0.0
  %360 = vmatpush1.xpose.msra.mxu0 0.0
  %361 = vmatprep.subr.mxu0 0.0
  %362 = vmatpush1.xpose.msra.mxu0 0.0
  %363 = vmatprep.subr.mxu0 0.0
  %364 = vmatpush1.xpose.msra.mxu0 0.0
  %365 = vmatprep.subr.mxu0 0.0
  %366 = vmatpush1.xpose.msra.mxu0 0.0
  %367 = vmatprep.subr.mxu0 0.0
  %368 = vmatpush1.xpose.msra.mxu0 0.0
  %369 = vmatprep.subr.mxu0 0.0
  %370 = vmatpush1.xpose.msra.mxu0 0.0
  %371 = vmatprep.mubr.f32.mxu0 %v163
  %372 = vmatmul.mubr.f32.gmra.mrb[0].mxu0 %v162
  %v373 = vpop.f32.mrb[0].mxu0
  %v374 = vadd.f32 %v304, %v373
  %v375 = vpop.f32.mrb[0].mxu0
  %376 = vdwg.mxu0
  %377 = vmatprep.subr.mxu0 %v165
  %378 = vmatpush1.xpose.msra.mxu0 %v164
  %379 = vmatprep.subr.mxu0 0.0
  %380 = vmatpush1.xpose.msra.mxu0 0.0
  %381 = vmatprep.subr.mxu0 0.0
  %382 = vmatpush1.xpose.msra.mxu0 0.0
  %383 = vmatprep.subr.mxu0 0.0
  %384 = vmatpush1.xpose.msra.mxu0 0.0
  %385 = vmatprep.subr.mxu0 0.0
  %386 = vmatpush1.xpose.msra.mxu0 0.0
  %387 = vmatprep.subr.mxu0 0.0
  %388 = vmatpush1.xpose.msra.mxu0 0.0
  %389 = vmatprep.subr.mxu0 0.0
  %390 = vmatpush1.xpose.msra.mxu0 0.0
  %391 = vmatprep.subr.mxu0 0.0
  %392 = vmatpush1.xpose.msra.mxu0 0.0
  %393 = vmatprep.subr.mxu0 0.0
  %394 = vmatpush1.xpose.msra.mxu0 0.0
  %395 = vmatprep.subr.mxu0 0.0
  %396 = vmatpush1.xpose.msra.mxu0 0.0
  %397 = vmatprep.subr.mxu0 0.0
  %398 = vmatpush1.xpose.msra.mxu0 0.0
  %399 = vmatprep.subr.mxu0 0.0
  %400 = vmatpush1.xpose.msra.mxu0 0.0
  %401 = vmatprep.subr.mxu0 0.0
  %402 = vmatpush1.xpose.msra.mxu0 0.0
  %403 = vmatprep.subr.mxu0 0.0
  %404 = vmatpush1.xpose.msra.mxu0 0.0
  %405 = vmatprep.subr.mxu0 0.0
  %406 = vmatpush1.xpose.msra.mxu0 0.0
  %407 = vmatprep.subr.mxu0 0.0
  %408 = vmatpush1.xpose.msra.mxu0 0.0
  %409 = vmatprep.subr.mxu0 0.0
  %410 = vmatpush1.xpose.msra.mxu0 0.0
  %411 = vmatprep.subr.mxu0 0.0
  %412 = vmatpush1.xpose.msra.mxu0 0.0
  %413 = vmatprep.subr.mxu0 0.0
  %414 = vmatpush1.xpose.msra.mxu0 0.0
  %415 = vmatprep.subr.mxu0 0.0
  %416 = vmatpush1.xpose.msra.mxu0 0.0
  %417 = vmatprep.subr.mxu0 0.0
  %418 = vmatpush1.xpose.msra.mxu0 0.0
  %419 = vmatprep.subr.mxu0 0.0
  %420 = vmatpush1.xpose.msra.mxu0 0.0
  %421 = vmatprep.subr.mxu0 0.0
  %422 = vmatpush1.xpose.msra.mxu0 0.0
  %423 = vmatprep.subr.mxu0 0.0
  %424 = vmatpush1.xpose.msra.mxu0 0.0
  %425 = vmatprep.subr.mxu0 0.0
  %426 = vmatpush1.xpose.msra.mxu0 0.0
  %427 = vmatprep.subr.mxu0 0.0
  %428 = vmatpush1.xpose.msra.mxu0 0.0
  %429 = vmatprep.subr.mxu0 0.0
  %430 = vmatpush1.xpose.msra.mxu0 0.0
  %431 = vmatprep.subr.mxu0 0.0
  %432 = vmatpush1.xpose.msra.mxu0 0.0
  %433 = vmatprep.subr.mxu0 0.0
  %434 = vmatpush1.xpose.msra.mxu0 0.0
  %435 = vmatprep.subr.mxu0 0.0
  %436 = vmatpush1.xpose.msra.mxu0 0.0
  %437 = vmatprep.subr.mxu0 0.0
  %438 = vmatpush1.xpose.msra.mxu0 0.0
  %439 = vmatprep.subr.mxu0 0.0
  %440 = vmatpush1.xpose.msra.mxu0 0.0
  %441 = vmatprep.mubr.f32.mxu0 %v165
  %442 = vmatmul.mubr.f32.gmra.mrb[0].mxu0 %v164
  %v443 = vpop.f32.mrb[0].mxu0
  %v444 = vadd.f32 %v374, %v443
  %v445 = vpop.f32.mrb[0].mxu0
  %446 = vdwg.mxu0
  %v447 = vadd.f32 %v166, %v444
  %vm448 = vcmask 9216
  %449 = vst.msk [vmem:[%s1] sm:$0x3] %vm448, %v447
  // Predicated region
  $region10: #{diff_loss.2} parent=0 // pred_check
    _
  $region11: #{diff_loss.2} parent=0 // pred_check_branch
    %451 = sbr.rel (0) target = $region13
  $region12: #{diff_loss.2} parent=0 // pred_region
    _
  $region13: #{diff_loss.2} parent=0 // pred_fallthru
    _
  // Predicated region
  $region14: #{diff_loss.2} parent=0 // pred_check
    _
  $region15: #{diff_loss.2} parent=0 // pred_check_branch
    %453 = sbr.rel (0) target = $region17
  $region16: #{diff_loss.2} parent=0 // pred_region
    _
  $region17: #{diff_loss.2} parent=0 // pred_fallthru
    _

</llo_original>
